<compile_context>
chip_gen: v6e
topology: v6e:2x2x1
jax: 0.10.0
libtpu: 0.0.40
codegen_flags: <defaults>
</compile_context>

<pallas_src>
import jax
import jax.numpy as jnp
from jax import lax
from jax.experimental import pallas as pl
from jax.experimental.pallas import tpu as pltpu


def _round_up(x: int, m: int) -> int:
    return ((x + m - 1) // m) * m


def _split_embed_kernel(ids_ref, flags_ref, rows_ref, train_ref, base_hbm_ref,
                        out_ref, gather_buf, dma_sem):
    """One grid step handles TOK tokens.

    ids_ref      : (N_pad,) int32  scalar-prefetch SMEM (token ids)
    flags_ref    : (nblk,)  int32  scalar-prefetch SMEM (block contains tuned id?)
    rows_ref     : (TOK, 1) int32  VMEM block (train row index, -1 => frozen)
    train_ref    : (T_pad, D)      VMEM-resident trainable rows
    base_hbm_ref : (V, D)          raw HBM ref (memory_space=pl.ANY)
    out_ref      : (TOK, D)        output block
    gather_buf   : (2, TOK, D)     VMEM double buffer for gathered base rows
    dma_sem      : (2,)            DMA semaphores, one per slot
    """
    i = pl.program_id(0)
    nblk = pl.num_programs(0)
    tok = out_ref.shape[0]
    cur = i % 2

    def issue(blk, slot):
        base = blk * tok

        def body(r, carry):
            tid = ids_ref[base + r]
            pltpu.make_async_copy(
                base_hbm_ref.at[pl.ds(tid, 1), :],
                gather_buf.at[slot, pl.ds(r, 1), :],
                dma_sem.at[slot],
            ).start()
            return carry

        # Partial unroll lets the scalar-load -> address-math -> descriptor
        # chains of neighbouring rows interleave on the 2 scalar + misc slots.
        lax.fori_loop(0, tok, body, 0, unroll=8)

    # Prime: the first grid step issues its own block's gathers.  The grid
    # axis is "arbitrary" (strictly sequential), so this runs exactly once.
    @pl.when(i == 0)
    def _():
        issue(0, 0)

    # Cross-step prefetch: issue block i+1's row gathers BEFORE waiting on
    # block i's, so the next block's HBM latency is hidden behind this step.
    @pl.when(i + 1 < nblk)
    def _():
        issue(i + 1, (i + 1) % 2)

    # Single batched wait for the current block's tok row copies.  DMA
    # semaphores account bytes, so one (tok, D)-sized descriptor wait matches
    # tok completed (1, D) copies exactly; no data moves here (the src ref is
    # only used for its byte count).
    pltpu.make_async_copy(out_ref, gather_buf.at[cur], dma_sem.at[cur]).wait()

    rows = rows_ref[...]                                     # (tok, 1), -1 => frozen

    @pl.when(flags_ref[i] != 0)
    def _():
        # Exact one-hot selection from the VMEM-resident train table, in the
        # native weight dtype (MXU path; exact for 0/1 one-hot rows).
        t_pad = train_ref.shape[0]
        rows_c = jnp.maximum(rows, 0)
        onehot = (jax.lax.broadcasted_iota(jnp.int32, (tok, t_pad), 1)
                  == rows_c).astype(train_ref.dtype)
        tuned = jnp.dot(onehot, train_ref[...],
                        preferred_element_type=jnp.float32).astype(out_ref.dtype)
        out_ref[...] = jnp.where(rows >= 0, tuned, gather_buf[cur])

    @pl.when(flags_ref[i] == 0)
    def _():
        # Common case: no tuned token in this block -> straight copy.
        out_ref[...] = gather_buf[cur]


def build_id2row(vocab_size: int, tune_ids):
    """O(V) scatter: id -> train row (-1 = frozen). Build ONCE per tune_ids
    (duplicates: last write wins, matching the PyTorch id2row dict)."""
    tune_ids = jnp.asarray(tune_ids, dtype=jnp.int32)
    return jnp.full((vocab_size,), -1, dtype=jnp.int32).at[tune_ids].set(
        jnp.arange(tune_ids.shape[0], dtype=jnp.int32)
    )


def split_embedding(input_ids, base_weight, train_weight, id2row,
                    *, block_tokens: int | None = None):
    """Pallas forward pass of SplitEmbedding.

    input_ids    : int array, any shape
    base_weight  : (V, D) float array (frozen buffer, stays in HBM)
    train_weight : (T, D) float array (trainable rows; T may be 0)
    id2row       : (V,) int32 from build_id2row (precomputed once)
    """
    V, D = base_weight.shape
    T = train_weight.shape[0]
    dtype = base_weight.dtype
    itemsize = jnp.dtype(dtype).itemsize
    # Native sublane packing: 8 rows for 4-byte, 16 for 2-byte, 32 for 1-byte.
    sub = max(8, 32 // itemsize)

    ids_flat = input_ids.reshape(-1).astype(jnp.int32)
    N = int(ids_flat.shape[0])

    # Token block size: target a ~2 MiB gather slab per slot, sublane-dense,
    # capped at 512 rows and at the (padded) token count.
    if block_tokens is None:
        target_bytes = 2 * 1024 * 1024
        block_tokens = max(sub, min(512, target_bytes // max(D * itemsize, 1)))
    tok = _round_up(min(int(block_tokens), _round_up(max(N, 1), sub)), sub)
    # Keep gather double-buffer + Pallas's double-buffered out blocks bounded.
    while tok > sub and 4 * tok * D * itemsize > 24 * 1024 * 1024:
        tok //= 2
    tok = _round_up(tok, sub)

    n_pad = _round_up(max(N, 1), tok)
    nblk = n_pad // tok

    # Pad ids (pad id 0 -> valid row, result sliced off) and rows (-1 = frozen).
    ids_pad = jnp.zeros((n_pad,), jnp.int32).at[:N].set(ids_flat)
    rows_flat = id2row[ids_flat]
    rows_pad = jnp.full((n_pad, 1), -1, jnp.int32).at[:N, 0].set(rows_flat)
    # Per-block "contains a tuned id" flag (scalar prefetch -> gates the
    # one-hot path inside the kernel).
    blk_has_tuned = (rows_pad[:, 0].reshape(nblk, tok) >= 0).any(axis=1)
    blk_has_tuned = blk_has_tuned.astype(jnp.int32)

    # Resident trainable table (padded so it is a legal VMEM block even for
    # T == 0; padding rows are never selected since their rows stay -1).
    t_pad = max(_round_up(max(T, 1), sub), sub)
    train_pad = jnp.zeros((t_pad, D), dtype).at[:T].set(train_weight.astype(dtype))

    t_bytes = t_pad * D * itemsize
    if t_bytes > 24 * 1024 * 1024:
        # TODO(synk): for very large tuned tables (>~1-2K rows x large D),
        # gather tuned rows by DMA like the base path instead of keeping the
        # table VMEM-resident / doing a one-hot matmul.
        raise NotImplementedError(
            f"train_weight too large to keep VMEM-resident ({t_bytes} bytes)")

    # VMEM footprint: gather (2x) + out blocks (2x, Pallas double buffer)
    # + resident train table + rows blocks.  Leave headroom, cap at v7x's
    # 64 MiB physical VMEM (also covers v5e's 16 MiB scoped default).
    vmem_bytes = (4 * tok * D + t_pad * D) * itemsize + 2 * tok * 4 + (1 << 20)
    vmem_limit = int(min(64 * 1024 * 1024, max(2 * vmem_bytes, 16 * 1024 * 1024)))

    out = pl.pallas_call(
        _split_embed_kernel,
        out_shape=jax.ShapeDtypeStruct((n_pad, D), dtype),
        grid_spec=pltpu.PrefetchScalarGridSpec(
            num_scalar_prefetch=2,                 # ids + per-block flags -> SMEM
            grid=(nblk,),
            in_specs=[
                # per-block train-row indices (vector path for the select)
                pl.BlockSpec((tok, 1), lambda i, ids, flags: (i, 0)),
                # trainable rows: fully VMEM-resident (constant block index)
                pl.BlockSpec((t_pad, D), lambda i, ids, flags: (0, 0)),
                # frozen table stays in HBM; gathered manually row-by-row
                pl.BlockSpec(memory_space=pl.ANY),
            ],
            out_specs=pl.BlockSpec((tok, D), lambda i, ids, flags: (i, 0)),
            scratch_shapes=[
                pltpu.VMEM((2, tok, D), dtype),    # double-buffered gather slab
                pltpu.SemaphoreType.DMA((2,)),     # one DMA sem per slot
            ],
        ),
        compiler_params=pltpu.CompilerParams(
            # "arbitrary": cross-step prefetch assumes sequential grid
            # execution (prime at step 0).  On v7x this forgoes the 2-TC
            # megacore split in exchange for correct, fully hidden gathers;
            # v5e/v6e have a single TensorCore so nothing is lost there.
            dimension_semantics=("arbitrary",),
            vmem_limit_bytes=vmem_limit,
        ),
    )(ids_pad, blk_has_tuned, rows_pad, train_pad, base_weight)

    return out[:N].reshape(input_ids.shape + (D,))


if __name__ == "__main__":
    # Small deterministic setup consistent with the module's __init__.
    V, D = 64, 128          # vocab size, embedding_dim (D = lane width)
    B, S = 2, 8             # batch, sequence length
    tune_ids = jnp.array([3, 7, 10, 42], dtype=jnp.int32)

    key = jax.random.PRNGKey(0)
    k_base, k_ids = jax.random.split(key)

    base_weight = jax.random.normal(k_base, (V, D), dtype=jnp.float32)
    # train_weight initialized from base rows (as in __init__) then perturbed
    # so the tuned path is observably different from the frozen path.
    train_weight = base_weight[tune_ids] + 1.0

    # Random input ids; force a few tuned ids to appear.
    input_ids = jax.random.randint(k_ids, (B, S), 0, V, dtype=jnp.int32)
    input_ids = input_ids.at[0, 0].set(3).at[0, 3].set(42).at[1, 5].set(7)

    # Hoisted: built once per fixed tune_ids.
    id2row = build_id2row(V, tune_ids)

    # Pure-JAX reference (equivalent to the PyTorch forward).
    full = base_weight.at[tune_ids].set(train_weight)
    ref = full[input_ids]

    # Small blocks: multi-block grid -> exercises priming + cross-step prefetch
    # and both (tuned / untuned) per-block branches.
    out_small = jax.block_until_ready(
        split_embedding(input_ids, base_weight, train_weight, id2row,
                        block_tokens=8))
    # Auto block size (single block here).
    out_auto = jax.block_until_ready(
        split_embedding(input_ids, base_weight, train_weight, id2row))
    # A batch containing no tuned ids at all (gated fast path only).
    ids_clean = jnp.full((B, S), 5, dtype=jnp.int32)
    out_clean = jax.block_until_ready(
        split_embedding(ids_clean, base_weight, train_weight, id2row,
                        block_tokens=8))

    for out, r in ((out_small, ref), (out_auto, ref), (out_clean, full[ids_clean])):
        assert out.shape == (B, S, D), out.shape
        assert out.dtype == jnp.float32
        assert jnp.allclose(out, r), "mismatch vs reference"

    print("KERNEL_OK")
</pallas_src>

<mosaic_0001>
module attributes {stable_mosaic.version = 11 : i64} {
  func.func @_split_embed_kernel(%arg0: i32, %arg1: memref<16xi32, #tpu.memory_space<smem>>, %arg2: memref<2xi32, #tpu.memory_space<smem>>, %arg3: memref<8x1xi32, #tpu.memory_space<vmem>>, %arg4: memref<8x128xf32, #tpu.memory_space<vmem>>, %arg5: memref<64x128xf32, #tpu.memory_space<any>>, %arg6: memref<8x128xf32, #tpu.memory_space<vmem>>, %arg7: memref<2x8x128xf32, #tpu.memory_space<vmem>>, %arg8: memref<2x!tpu.dma_semaphore, #tpu.memory_space<semaphore_mem>>) attributes {dimension_semantics = [#tpu.dimension_semantics<arbitrary>], iteration_bounds = array<i64: 2>, scalar_prefetch = 2 : i64, scratch_operands = 2 : i64, tpu.core_type = #tpu.core_type<tc>, window_params = [{transform_indices = @transform_0, window_bounds = array<i64: 8, 1>}, {pipeline_mode = #tpu.pipeline_mode<synchronous>, transform_indices = @transform_1, window_bounds = array<i64: 8, 128>}, {}, {transform_indices = @transform_3, window_bounds = array<i64: 8, 128>}]} {
    %c2_i32 = arith.constant 2 : i32
    %c0_i32 = arith.constant 0 : i32
    %0 = arith.cmpi eq, %c2_i32, %c0_i32 : i32
    %c1_i32 = arith.constant 1 : i32
    %1 = arith.select %0, %c1_i32, %c2_i32 : i32
    %2 = arith.remsi %arg0, %1 : i32
    %c0_i32_0 = arith.constant 0 : i32
    %3 = arith.cmpi ne, %2, %c0_i32_0 : i32
    %c0_i32_1 = arith.constant 0 : i32
    %4 = arith.cmpi slt, %2, %c0_i32_1 : i32
    %c0_i32_2 = arith.constant 0 : i32
    %5 = arith.cmpi slt, %1, %c0_i32_2 : i32
    %6 = arith.xori %4, %5 : i1
    %7 = arith.andi %6, %3 : i1
    %8 = arith.addi %2, %1 : i32
    %9 = arith.select %7, %8, %2 : i32
    %c0_i32_3 = arith.constant 0 : i32
    %10 = arith.cmpi eq, %arg0, %c0_i32_3 : i32
    %11 = arith.extui %10 : i1 to i32
    %c0_i32_4 = arith.constant 0 : i32
    %12 = arith.cmpi ne, %11, %c0_i32_4 : i32
    scf.if %12 {
      %c0_i32_15 = arith.constant 0 : i32
      %c0_i32_16 = arith.constant 0 : i32
      %32 = arith.addi %c0_i32_16, %c0_i32_15 : i32
      %33 = arith.index_cast %32 : i32 to index
      %34 = memref.load %arg1[%33] : memref<16xi32, #tpu.memory_space<smem>>
      %c0_i32_17 = arith.constant 0 : i32
      %c0_i32_18 = arith.constant 0 : i32
      %c0_i32_19 = arith.constant 0 : i32
      %35 = tpu.memref_slice %arg5[%34, %c0_i32_19] : memref<64x128xf32, #tpu.memory_space<any>> -> memref<1x128xf32, #tpu.memory_space<any>>
      %c0_i32_20 = arith.constant 0 : i32
      %36 = tpu.memref_slice %arg7[%c0_i32_17, %c0_i32_15, %c0_i32_20] : memref<2x8x128xf32, #tpu.memory_space<vmem>> -> memref<1x1x128xf32, #tpu.memory_space<vmem>>
      %37 = tpu.memref_squeeze %36 : memref<1x1x128xf32, #tpu.memory_space<vmem>> -> memref<1x128xf32, #tpu.memory_space<vmem>>
      %38 = tpu.memref_slice %arg8[%c0_i32_18] : memref<2x!tpu.dma_semaphore, #tpu.memory_space<semaphore_mem>> -> memref<1x!tpu.dma_semaphore, #tpu.memory_space<semaphore_mem>>
      %39 = tpu.memref_squeeze %38 : memref<1x!tpu.dma_semaphore, #tpu.memory_space<semaphore_mem>> -> memref<!tpu.dma_semaphore, #tpu.memory_space<semaphore_mem>>
      tpu.enqueue_dma source(%35 : memref<1x128xf32, #tpu.memory_space<any>>) target(%37 : memref<1x128xf32, #tpu.memory_space<vmem>>) target_semaphore(%39 : memref<!tpu.dma_semaphore, #tpu.memory_space<semaphore_mem>>)
      %c1_i32_21 = arith.constant 1 : i32
      %c0_i32_22 = arith.constant 0 : i32
      %40 = arith.addi %c0_i32_22, %c1_i32_21 : i32
      %41 = arith.index_cast %40 : i32 to index
      %42 = memref.load %arg1[%41] : memref<16xi32, #tpu.memory_space<smem>>
      %c0_i32_23 = arith.constant 0 : i32
      %c0_i32_24 = arith.constant 0 : i32
      %c0_i32_25 = arith.constant 0 : i32
      %43 = tpu.memref_slice %arg5[%42, %c0_i32_25] : memref<64x128xf32, #tpu.memory_space<any>> -> memref<1x128xf32, #tpu.memory_space<any>>
      %c0_i32_26 = arith.constant 0 : i32
      %44 = tpu.memref_slice %arg7[%c0_i32_23, %c1_i32_21, %c0_i32_26] : memref<2x8x128xf32, #tpu.memory_space<vmem>> -> memref<1x1x128xf32, #tpu.memory_space<vmem>>
      %45 = tpu.memref_squeeze %44 : memref<1x1x128xf32, #tpu.memory_space<vmem>> -> memref<1x128xf32, #tpu.memory_space<vmem>>
      %46 = tpu.memref_slice %arg8[%c0_i32_24] : memref<2x!tpu.dma_semaphore, #tpu.memory_space<semaphore_mem>> -> memref<1x!tpu.dma_semaphore, #tpu.memory_space<semaphore_mem>>
      %47 = tpu.memref_squeeze %46 : memref<1x!tpu.dma_semaphore, #tpu.memory_space<semaphore_mem>> -> memref<!tpu.dma_semaphore, #tpu.memory_space<semaphore_mem>>
      tpu.enqueue_dma source(%43 : memref<1x128xf32, #tpu.memory_space<any>>) target(%45 : memref<1x128xf32, #tpu.memory_space<vmem>>) target_semaphore(%47 : memref<!tpu.dma_semaphore, #tpu.memory_space<semaphore_mem>>)
      %c2_i32_27 = arith.constant 2 : i32
      %c0_i32_28 = arith.constant 0 : i32
      %48 = arith.addi %c0_i32_28, %c2_i32_27 : i32
      %49 = arith.index_cast %48 : i32 to index
      %50 = memref.load %arg1[%49] : memref<16xi32, #tpu.memory_space<smem>>
      %c0_i32_29 = arith.constant 0 : i32
      %c0_i32_30 = arith.constant 0 : i32
      %c0_i32_31 = arith.constant 0 : i32
      %51 = tpu.memref_slice %arg5[%50, %c0_i32_31] : memref<64x128xf32, #tpu.memory_space<any>> -> memref<1x128xf32, #tpu.memory_space<any>>
      %c0_i32_32 = arith.constant 0 : i32
      %52 = tpu.memref_slice %arg7[%c0_i32_29, %c2_i32_27, %c0_i32_32] : memref<2x8x128xf32, #tpu.memory_space<vmem>> -> memref<1x1x128xf32, #tpu.memory_space<vmem>>
      %53 = tpu.memref_squeeze %52 : memref<1x1x128xf32, #tpu.memory_space<vmem>> -> memref<1x128xf32, #tpu.memory_space<vmem>>
      %54 = tpu.memref_slice %arg8[%c0_i32_30] : memref<2x!tpu.dma_semaphore, #tpu.memory_space<semaphore_mem>> -> memref<1x!tpu.dma_semaphore, #tpu.memory_space<semaphore_mem>>
      %55 = tpu.memref_squeeze %54 : memref<1x!tpu.dma_semaphore, #tpu.memory_space<semaphore_mem>> -> memref<!tpu.dma_semaphore, #tpu.memory_space<semaphore_mem>>
      tpu.enqueue_dma source(%51 : memref<1x128xf32, #tpu.memory_space<any>>) target(%53 : memref<1x128xf32, #tpu.memory_space<vmem>>) target_semaphore(%55 : memref<!tpu.dma_semaphore, #tpu.memory_space<semaphore_mem>>)
      %c3_i32 = arith.constant 3 : i32
      %c0_i32_33 = arith.constant 0 : i32
      %56 = arith.addi %c0_i32_33, %c3_i32 : i32
      %57 = arith.index_cast %56 : i32 to index
      %58 = memref.load %arg1[%57] : memref<16xi32, #tpu.memory_space<smem>>
      %c0_i32_34 = arith.constant 0 : i32
      %c0_i32_35 = arith.constant 0 : i32
      %c0_i32_36 = arith.constant 0 : i32
      %59 = tpu.memref_slice %arg5[%58, %c0_i32_36] : memref<64x128xf32, #tpu.memory_space<any>> -> memref<1x128xf32, #tpu.memory_space<any>>
      %c0_i32_37 = arith.constant 0 : i32
      %60 = tpu.memref_slice %arg7[%c0_i32_34, %c3_i32, %c0_i32_37] : memref<2x8x128xf32, #tpu.memory_space<vmem>> -> memref<1x1x128xf32, #tpu.memory_space<vmem>>
      %61 = tpu.memref_squeeze %60 : memref<1x1x128xf32, #tpu.memory_space<vmem>> -> memref<1x128xf32, #tpu.memory_space<vmem>>
      %62 = tpu.memref_slice %arg8[%c0_i32_35] : memref<2x!tpu.dma_semaphore, #tpu.memory_space<semaphore_mem>> -> memref<1x!tpu.dma_semaphore, #tpu.memory_space<semaphore_mem>>
      %63 = tpu.memref_squeeze %62 : memref<1x!tpu.dma_semaphore, #tpu.memory_space<semaphore_mem>> -> memref<!tpu.dma_semaphore, #tpu.memory_space<semaphore_mem>>
      tpu.enqueue_dma source(%59 : memref<1x128xf32, #tpu.memory_space<any>>) target(%61 : memref<1x128xf32, #tpu.memory_space<vmem>>) target_semaphore(%63 : memref<!tpu.dma_semaphore, #tpu.memory_space<semaphore_mem>>)
      %c4_i32 = arith.constant 4 : i32
      %c0_i32_38 = arith.constant 0 : i32
      %64 = arith.addi %c0_i32_38, %c4_i32 : i32
      %65 = arith.index_cast %64 : i32 to index
      %66 = memref.load %arg1[%65] : memref<16xi32, #tpu.memory_space<smem>>
      %c0_i32_39 = arith.constant 0 : i32
      %c0_i32_40 = arith.constant 0 : i32
      %c0_i32_41 = arith.constant 0 : i32
      %67 = tpu.memref_slice %arg5[%66, %c0_i32_41] : memref<64x128xf32, #tpu.memory_space<any>> -> memref<1x128xf32, #tpu.memory_space<any>>
      %c0_i32_42 = arith.constant 0 : i32
      %68 = tpu.memref_slice %arg7[%c0_i32_39, %c4_i32, %c0_i32_42] : memref<2x8x128xf32, #tpu.memory_space<vmem>> -> memref<1x1x128xf32, #tpu.memory_space<vmem>>
      %69 = tpu.memref_squeeze %68 : memref<1x1x128xf32, #tpu.memory_space<vmem>> -> memref<1x128xf32, #tpu.memory_space<vmem>>
      %70 = tpu.memref_slice %arg8[%c0_i32_40] : memref<2x!tpu.dma_semaphore, #tpu.memory_space<semaphore_mem>> -> memref<1x!tpu.dma_semaphore, #tpu.memory_space<semaphore_mem>>
      %71 = tpu.memref_squeeze %70 : memref<1x!tpu.dma_semaphore, #tpu.memory_space<semaphore_mem>> -> memref<!tpu.dma_semaphore, #tpu.memory_space<semaphore_mem>>
      tpu.enqueue_dma source(%67 : memref<1x128xf32, #tpu.memory_space<any>>) target(%69 : memref<1x128xf32, #tpu.memory_space<vmem>>) target_semaphore(%71 : memref<!tpu.dma_semaphore, #tpu.memory_space<semaphore_mem>>)
      %c5_i32 = arith.constant 5 : i32
      %c0_i32_43 = arith.constant 0 : i32
      %72 = arith.addi %c0_i32_43, %c5_i32 : i32
      %73 = arith.index_cast %72 : i32 to index
      %74 = memref.load %arg1[%73] : memref<16xi32, #tpu.memory_space<smem>>
      %c0_i32_44 = arith.constant 0 : i32
      %c0_i32_45 = arith.constant 0 : i32
      %c0_i32_46 = arith.constant 0 : i32
      %75 = tpu.memref_slice %arg5[%74, %c0_i32_46] : memref<64x128xf32, #tpu.memory_space<any>> -> memref<1x128xf32, #tpu.memory_space<any>>
      %c0_i32_47 = arith.constant 0 : i32
      %76 = tpu.memref_slice %arg7[%c0_i32_44, %c5_i32, %c0_i32_47] : memref<2x8x128xf32, #tpu.memory_space<vmem>> -> memref<1x1x128xf32, #tpu.memory_space<vmem>>
      %77 = tpu.memref_squeeze %76 : memref<1x1x128xf32, #tpu.memory_space<vmem>> -> memref<1x128xf32, #tpu.memory_space<vmem>>
      %78 = tpu.memref_slice %arg8[%c0_i32_45] : memref<2x!tpu.dma_semaphore, #tpu.memory_space<semaphore_mem>> -> memref<1x!tpu.dma_semaphore, #tpu.memory_space<semaphore_mem>>
      %79 = tpu.memref_squeeze %78 : memref<1x!tpu.dma_semaphore, #tpu.memory_space<semaphore_mem>> -> memref<!tpu.dma_semaphore, #tpu.memory_space<semaphore_mem>>
      tpu.enqueue_dma source(%75 : memref<1x128xf32, #tpu.memory_space<any>>) target(%77 : memref<1x128xf32, #tpu.memory_space<vmem>>) target_semaphore(%79 : memref<!tpu.dma_semaphore, #tpu.memory_space<semaphore_mem>>)
      %c6_i32 = arith.constant 6 : i32
      %c0_i32_48 = arith.constant 0 : i32
      %80 = arith.addi %c0_i32_48, %c6_i32 : i32
      %81 = arith.index_cast %80 : i32 to index
      %82 = memref.load %arg1[%81] : memref<16xi32, #tpu.memory_space<smem>>
      %c0_i32_49 = arith.constant 0 : i32
      %c0_i32_50 = arith.constant 0 : i32
      %c0_i32_51 = arith.constant 0 : i32
      %83 = tpu.memref_slice %arg5[%82, %c0_i32_51] : memref<64x128xf32, #tpu.memory_space<any>> -> memref<1x128xf32, #tpu.memory_space<any>>
      %c0_i32_52 = arith.constant 0 : i32
      %84 = tpu.memref_slice %arg7[%c0_i32_49, %c6_i32, %c0_i32_52] : memref<2x8x128xf32, #tpu.memory_space<vmem>> -> memref<1x1x128xf32, #tpu.memory_space<vmem>>
      %85 = tpu.memref_squeeze %84 : memref<1x1x128xf32, #tpu.memory_space<vmem>> -> memref<1x128xf32, #tpu.memory_space<vmem>>
      %86 = tpu.memref_slice %arg8[%c0_i32_50] : memref<2x!tpu.dma_semaphore, #tpu.memory_space<semaphore_mem>> -> memref<1x!tpu.dma_semaphore, #tpu.memory_space<semaphore_mem>>
      %87 = tpu.memref_squeeze %86 : memref<1x!tpu.dma_semaphore, #tpu.memory_space<semaphore_mem>> -> memref<!tpu.dma_semaphore, #tpu.memory_space<semaphore_mem>>
      tpu.enqueue_dma source(%83 : memref<1x128xf32, #tpu.memory_space<any>>) target(%85 : memref<1x128xf32, #tpu.memory_space<vmem>>) target_semaphore(%87 : memref<!tpu.dma_semaphore, #tpu.memory_space<semaphore_mem>>)
      %c7_i32 = arith.constant 7 : i32
      %c0_i32_53 = arith.constant 0 : i32
      %88 = arith.addi %c0_i32_53, %c7_i32 : i32
      %89 = arith.index_cast %88 : i32 to index
      %90 = memref.load %arg1[%89] : memref<16xi32, #tpu.memory_space<smem>>
      %c0_i32_54 = arith.constant 0 : i32
      %c0_i32_55 = arith.constant 0 : i32
      %c0_i32_56 = arith.constant 0 : i32
      %91 = tpu.memref_slice %arg5[%90, %c0_i32_56] : memref<64x128xf32, #tpu.memory_space<any>> -> memref<1x128xf32, #tpu.memory_space<any>>
      %c0_i32_57 = arith.constant 0 : i32
      %92 = tpu.memref_slice %arg7[%c0_i32_54, %c7_i32, %c0_i32_57] : memref<2x8x128xf32, #tpu.memory_space<vmem>> -> memref<1x1x128xf32, #tpu.memory_space<vmem>>
      %93 = tpu.memref_squeeze %92 : memref<1x1x128xf32, #tpu.memory_space<vmem>> -> memref<1x128xf32, #tpu.memory_space<vmem>>
      %94 = tpu.memref_slice %arg8[%c0_i32_55] : memref<2x!tpu.dma_semaphore, #tpu.memory_space<semaphore_mem>> -> memref<1x!tpu.dma_semaphore, #tpu.memory_space<semaphore_mem>>
      %95 = tpu.memref_squeeze %94 : memref<1x!tpu.dma_semaphore, #tpu.memory_space<semaphore_mem>> -> memref<!tpu.dma_semaphore, #tpu.memory_space<semaphore_mem>>
      tpu.enqueue_dma source(%91 : memref<1x128xf32, #tpu.memory_space<any>>) target(%93 : memref<1x128xf32, #tpu.memory_space<vmem>>) target_semaphore(%95 : memref<!tpu.dma_semaphore, #tpu.memory_space<semaphore_mem>>)
      %c8_i32 = arith.constant 8 : i32
    } else {
    }
    %c1_i32_5 = arith.constant 1 : i32
    %13 = arith.addi %arg0, %c1_i32_5 : i32
    %c2_i32_6 = arith.constant 2 : i32
    %14 = arith.cmpi slt, %13, %c2_i32_6 : i32
    %15 = arith.extui %14 : i1 to i32
    %c0_i32_7 = arith.constant 0 : i32
    %16 = arith.cmpi ne, %15, %c0_i32_7 : i32
    scf.if %16 {
      %c1_i32_15 = arith.constant 1 : i32
      %32 = arith.addi %arg0, %c1_i32_15 : i32
      %c1_i32_16 = arith.constant 1 : i32
      %33 = arith.addi %arg0, %c1_i32_16 : i32
      %c2_i32_17 = arith.constant 2 : i32
      %c0_i32_18 = arith.constant 0 : i32
      %34 = arith.cmpi eq, %c2_i32_17, %c0_i32_18 : i32
      %c1_i32_19 = arith.constant 1 : i32
      %35 = arith.select %34, %c1_i32_19, %c2_i32_17 : i32
      %36 = arith.remsi %33, %35 : i32
      %c0_i32_20 = arith.constant 0 : i32
      %37 = arith.cmpi ne, %36, %c0_i32_20 : i32
      %c0_i32_21 = arith.constant 0 : i32
      %38 = arith.cmpi slt, %36, %c0_i32_21 : i32
      %c0_i32_22 = arith.constant 0 : i32
      %39 = arith.cmpi slt, %35, %c0_i32_22 : i32
      %40 = arith.xori %38, %39 : i1
      %41 = arith.andi %40, %37 : i1
      %42 = arith.addi %36, %35 : i32
      %43 = arith.select %41, %42, %36 : i32
      %c8_i32 = arith.constant 8 : i32
      %44 = arith.muli %32, %c8_i32 : i32
      %c0_i32_23 = arith.constant 0 : i32
      %45 = arith.addi %44, %c0_i32_23 : i32
      %46 = arith.index_cast %45 : i32 to index
      %47 = memref.load %arg1[%46] : memref<16xi32, #tpu.memory_space<smem>>
      %c0_i32_24 = arith.constant 0 : i32
      %48 = tpu.memref_slice %arg5[%47, %c0_i32_24] : memref<64x128xf32, #tpu.memory_space<any>> -> memref<1x128xf32, #tpu.memory_space<any>>
      %c0_i32_25 = arith.constant 0 : i32
      %49 = tpu.memref_slice %arg7[%43, %c0_i32_23, %c0_i32_25] : memref<2x8x128xf32, #tpu.memory_space<vmem>> -> memref<1x1x128xf32, #tpu.memory_space<vmem>>
      %50 = tpu.memref_squeeze %49 : memref<1x1x128xf32, #tpu.memory_space<vmem>> -> memref<1x128xf32, #tpu.memory_space<vmem>>
      %51 = tpu.memref_slice %arg8[%43] : memref<2x!tpu.dma_semaphore, #tpu.memory_space<semaphore_mem>> -> memref<1x!tpu.dma_semaphore, #tpu.memory_space<semaphore_mem>>
      %52 = tpu.memref_squeeze %51 : memref<1x!tpu.dma_semaphore, #tpu.memory_space<semaphore_mem>> -> memref<!tpu.dma_semaphore, #tpu.memory_space<semaphore_mem>>
      tpu.enqueue_dma source(%48 : memref<1x128xf32, #tpu.memory_space<any>>) target(%50 : memref<1x128xf32, #tpu.memory_space<vmem>>) target_semaphore(%52 : memref<!tpu.dma_semaphore, #tpu.memory_space<semaphore_mem>>)
      %c1_i32_26 = arith.constant 1 : i32
      %53 = arith.addi %44, %c1_i32_26 : i32
      %54 = arith.index_cast %53 : i32 to index
      %55 = memref.load %arg1[%54] : memref<16xi32, #tpu.memory_space<smem>>
      %c0_i32_27 = arith.constant 0 : i32
      %56 = tpu.memref_slice %arg5[%55, %c0_i32_27] : memref<64x128xf32, #tpu.memory_space<any>> -> memref<1x128xf32, #tpu.memory_space<any>>
      %c0_i32_28 = arith.constant 0 : i32
      %57 = tpu.memref_slice %arg7[%43, %c1_i32_26, %c0_i32_28] : memref<2x8x128xf32, #tpu.memory_space<vmem>> -> memref<1x1x128xf32, #tpu.memory_space<vmem>>
      %58 = tpu.memref_squeeze %57 : memref<1x1x128xf32, #tpu.memory_space<vmem>> -> memref<1x128xf32, #tpu.memory_space<vmem>>
      %59 = tpu.memref_slice %arg8[%43] : memref<2x!tpu.dma_semaphore, #tpu.memory_space<semaphore_mem>> -> memref<1x!tpu.dma_semaphore, #tpu.memory_space<semaphore_mem>>
      %60 = tpu.memref_squeeze %59 : memref<1x!tpu.dma_semaphore, #tpu.memory_space<semaphore_mem>> -> memref<!tpu.dma_semaphore, #tpu.memory_space<semaphore_mem>>
      tpu.enqueue_dma source(%56 : memref<1x128xf32, #tpu.memory_space<any>>) target(%58 : memref<1x128xf32, #tpu.memory_space<vmem>>) target_semaphore(%60 : memref<!tpu.dma_semaphore, #tpu.memory_space<semaphore_mem>>)
      %c2_i32_29 = arith.constant 2 : i32
      %61 = arith.addi %44, %c2_i32_29 : i32
      %62 = arith.index_cast %61 : i32 to index
      %63 = memref.load %arg1[%62] : memref<16xi32, #tpu.memory_space<smem>>
      %c0_i32_30 = arith.constant 0 : i32
      %64 = tpu.memref_slice %arg5[%63, %c0_i32_30] : memref<64x128xf32, #tpu.memory_space<any>> -> memref<1x128xf32, #tpu.memory_space<any>>
      %c0_i32_31 = arith.constant 0 : i32
      %65 = tpu.memref_slice %arg7[%43, %c2_i32_29, %c0_i32_31] : memref<2x8x128xf32, #tpu.memory_space<vmem>> -> memref<1x1x128xf32, #tpu.memory_space<vmem>>
      %66 = tpu.memref_squeeze %65 : memref<1x1x128xf32, #tpu.memory_space<vmem>> -> memref<1x128xf32, #tpu.memory_space<vmem>>
      %67 = tpu.memref_slice %arg8[%43] : memref<2x!tpu.dma_semaphore, #tpu.memory_space<semaphore_mem>> -> memref<1x!tpu.dma_semaphore, #tpu.memory_space<semaphore_mem>>
      %68 = tpu.memref_squeeze %67 : memref<1x!tpu.dma_semaphore, #tpu.memory_space<semaphore_mem>> -> memref<!tpu.dma_semaphore, #tpu.memory_space<semaphore_mem>>
      tpu.enqueue_dma source(%64 : memref<1x128xf32, #tpu.memory_space<any>>) target(%66 : memref<1x128xf32, #tpu.memory_space<vmem>>) target_semaphore(%68 : memref<!tpu.dma_semaphore, #tpu.memory_space<semaphore_mem>>)
      %c3_i32 = arith.constant 3 : i32
      %69 = arith.addi %44, %c3_i32 : i32
      %70 = arith.index_cast %69 : i32 to index
      %71 = memref.load %arg1[%70] : memref<16xi32, #tpu.memory_space<smem>>
      %c0_i32_32 = arith.constant 0 : i32
      %72 = tpu.memref_slice %arg5[%71, %c0_i32_32] : memref<64x128xf32, #tpu.memory_space<any>> -> memref<1x128xf32, #tpu.memory_space<any>>
      %c0_i32_33 = arith.constant 0 : i32
      %73 = tpu.memref_slice %arg7[%43, %c3_i32, %c0_i32_33] : memref<2x8x128xf32, #tpu.memory_space<vmem>> -> memref<1x1x128xf32, #tpu.memory_space<vmem>>
      %74 = tpu.memref_squeeze %73 : memref<1x1x128xf32, #tpu.memory_space<vmem>> -> memref<1x128xf32, #tpu.memory_space<vmem>>
      %75 = tpu.memref_slice %arg8[%43] : memref<2x!tpu.dma_semaphore, #tpu.memory_space<semaphore_mem>> -> memref<1x!tpu.dma_semaphore, #tpu.memory_space<semaphore_mem>>
      %76 = tpu.memref_squeeze %75 : memref<1x!tpu.dma_semaphore, #tpu.memory_space<semaphore_mem>> -> memref<!tpu.dma_semaphore, #tpu.memory_space<semaphore_mem>>
      tpu.enqueue_dma source(%72 : memref<1x128xf32, #tpu.memory_space<any>>) target(%74 : memref<1x128xf32, #tpu.memory_space<vmem>>) target_semaphore(%76 : memref<!tpu.dma_semaphore, #tpu.memory_space<semaphore_mem>>)
      %c4_i32 = arith.constant 4 : i32
      %77 = arith.addi %44, %c4_i32 : i32
      %78 = arith.index_cast %77 : i32 to index
      %79 = memref.load %arg1[%78] : memref<16xi32, #tpu.memory_space<smem>>
      %c0_i32_34 = arith.constant 0 : i32
      %80 = tpu.memref_slice %arg5[%79, %c0_i32_34] : memref<64x128xf32, #tpu.memory_space<any>> -> memref<1x128xf32, #tpu.memory_space<any>>
      %c0_i32_35 = arith.constant 0 : i32
      %81 = tpu.memref_slice %arg7[%43, %c4_i32, %c0_i32_35] : memref<2x8x128xf32, #tpu.memory_space<vmem>> -> memref<1x1x128xf32, #tpu.memory_space<vmem>>
      %82 = tpu.memref_squeeze %81 : memref<1x1x128xf32, #tpu.memory_space<vmem>> -> memref<1x128xf32, #tpu.memory_space<vmem>>
      %83 = tpu.memref_slice %arg8[%43] : memref<2x!tpu.dma_semaphore, #tpu.memory_space<semaphore_mem>> -> memref<1x!tpu.dma_semaphore, #tpu.memory_space<semaphore_mem>>
      %84 = tpu.memref_squeeze %83 : memref<1x!tpu.dma_semaphore, #tpu.memory_space<semaphore_mem>> -> memref<!tpu.dma_semaphore, #tpu.memory_space<semaphore_mem>>
      tpu.enqueue_dma source(%80 : memref<1x128xf32, #tpu.memory_space<any>>) target(%82 : memref<1x128xf32, #tpu.memory_space<vmem>>) target_semaphore(%84 : memref<!tpu.dma_semaphore, #tpu.memory_space<semaphore_mem>>)
      %c5_i32 = arith.constant 5 : i32
      %85 = arith.addi %44, %c5_i32 : i32
      %86 = arith.index_cast %85 : i32 to index
      %87 = memref.load %arg1[%86] : memref<16xi32, #tpu.memory_space<smem>>
      %c0_i32_36 = arith.constant 0 : i32
      %88 = tpu.memref_slice %arg5[%87, %c0_i32_36] : memref<64x128xf32, #tpu.memory_space<any>> -> memref<1x128xf32, #tpu.memory_space<any>>
      %c0_i32_37 = arith.constant 0 : i32
      %89 = tpu.memref_slice %arg7[%43, %c5_i32, %c0_i32_37] : memref<2x8x128xf32, #tpu.memory_space<vmem>> -> memref<1x1x128xf32, #tpu.memory_space<vmem>>
      %90 = tpu.memref_squeeze %89 : memref<1x1x128xf32, #tpu.memory_space<vmem>> -> memref<1x128xf32, #tpu.memory_space<vmem>>
      %91 = tpu.memref_slice %arg8[%43] : memref<2x!tpu.dma_semaphore, #tpu.memory_space<semaphore_mem>> -> memref<1x!tpu.dma_semaphore, #tpu.memory_space<semaphore_mem>>
      %92 = tpu.memref_squeeze %91 : memref<1x!tpu.dma_semaphore, #tpu.memory_space<semaphore_mem>> -> memref<!tpu.dma_semaphore, #tpu.memory_space<semaphore_mem>>
      tpu.enqueue_dma source(%88 : memref<1x128xf32, #tpu.memory_space<any>>) target(%90 : memref<1x128xf32, #tpu.memory_space<vmem>>) target_semaphore(%92 : memref<!tpu.dma_semaphore, #tpu.memory_space<semaphore_mem>>)
      %c6_i32 = arith.constant 6 : i32
      %93 = arith.addi %44, %c6_i32 : i32
      %94 = arith.index_cast %93 : i32 to index
      %95 = memref.load %arg1[%94] : memref<16xi32, #tpu.memory_space<smem>>
      %c0_i32_38 = arith.constant 0 : i32
      %96 = tpu.memref_slice %arg5[%95, %c0_i32_38] : memref<64x128xf32, #tpu.memory_space<any>> -> memref<1x128xf32, #tpu.memory_space<any>>
      %c0_i32_39 = arith.constant 0 : i32
      %97 = tpu.memref_slice %arg7[%43, %c6_i32, %c0_i32_39] : memref<2x8x128xf32, #tpu.memory_space<vmem>> -> memref<1x1x128xf32, #tpu.memory_space<vmem>>
      %98 = tpu.memref_squeeze %97 : memref<1x1x128xf32, #tpu.memory_space<vmem>> -> memref<1x128xf32, #tpu.memory_space<vmem>>
      %99 = tpu.memref_slice %arg8[%43] : memref<2x!tpu.dma_semaphore, #tpu.memory_space<semaphore_mem>> -> memref<1x!tpu.dma_semaphore, #tpu.memory_space<semaphore_mem>>
      %100 = tpu.memref_squeeze %99 : memref<1x!tpu.dma_semaphore, #tpu.memory_space<semaphore_mem>> -> memref<!tpu.dma_semaphore, #tpu.memory_space<semaphore_mem>>
      tpu.enqueue_dma source(%96 : memref<1x128xf32, #tpu.memory_space<any>>) target(%98 : memref<1x128xf32, #tpu.memory_space<vmem>>) target_semaphore(%100 : memref<!tpu.dma_semaphore, #tpu.memory_space<semaphore_mem>>)
      %c7_i32 = arith.constant 7 : i32
      %101 = arith.addi %44, %c7_i32 : i32
      %102 = arith.index_cast %101 : i32 to index
      %103 = memref.load %arg1[%102] : memref<16xi32, #tpu.memory_space<smem>>
      %c0_i32_40 = arith.constant 0 : i32
      %104 = tpu.memref_slice %arg5[%103, %c0_i32_40] : memref<64x128xf32, #tpu.memory_space<any>> -> memref<1x128xf32, #tpu.memory_space<any>>
      %c0_i32_41 = arith.constant 0 : i32
      %105 = tpu.memref_slice %arg7[%43, %c7_i32, %c0_i32_41] : memref<2x8x128xf32, #tpu.memory_space<vmem>> -> memref<1x1x128xf32, #tpu.memory_space<vmem>>
      %106 = tpu.memref_squeeze %105 : memref<1x1x128xf32, #tpu.memory_space<vmem>> -> memref<1x128xf32, #tpu.memory_space<vmem>>
      %107 = tpu.memref_slice %arg8[%43] : memref<2x!tpu.dma_semaphore, #tpu.memory_space<semaphore_mem>> -> memref<1x!tpu.dma_semaphore, #tpu.memory_space<semaphore_mem>>
      %108 = tpu.memref_squeeze %107 : memref<1x!tpu.dma_semaphore, #tpu.memory_space<semaphore_mem>> -> memref<!tpu.dma_semaphore, #tpu.memory_space<semaphore_mem>>
      tpu.enqueue_dma source(%104 : memref<1x128xf32, #tpu.memory_space<any>>) target(%106 : memref<1x128xf32, #tpu.memory_space<vmem>>) target_semaphore(%108 : memref<!tpu.dma_semaphore, #tpu.memory_space<semaphore_mem>>)
      %c8_i32_42 = arith.constant 8 : i32
    } else {
    }
    %c0_i32_8 = arith.constant 0 : i32
    %c0_i32_9 = arith.constant 0 : i32
    %17 = tpu.memref_slice %arg7[%9, %c0_i32_8, %c0_i32_9] : memref<2x8x128xf32, #tpu.memory_space<vmem>> -> memref<1x8x128xf32, #tpu.memory_space<vmem>>
    %18 = tpu.memref_squeeze %17 : memref<1x8x128xf32, #tpu.memory_space<vmem>> -> memref<8x128xf32, #tpu.memory_space<vmem>>
    %19 = tpu.memref_slice %arg8[%9] : memref<2x!tpu.dma_semaphore, #tpu.memory_space<semaphore_mem>> -> memref<1x!tpu.dma_semaphore, #tpu.memory_space<semaphore_mem>>
    %20 = tpu.memref_squeeze %19 : memref<1x!tpu.dma_semaphore, #tpu.memory_space<semaphore_mem>> -> memref<!tpu.dma_semaphore, #tpu.memory_space<semaphore_mem>>
    tpu.wait_dma2 semaphore(%20 : memref<!tpu.dma_semaphore, #tpu.memory_space<semaphore_mem>>) src(%arg6 : memref<8x128xf32, #tpu.memory_space<vmem>>) dst(%18 : memref<8x128xf32, #tpu.memory_space<vmem>>)
    %c0 = arith.constant 0 : index
    %c0_10 = arith.constant 0 : index
    %21 = vector.load %arg3[%c0, %c0_10] : memref<8x1xi32, #tpu.memory_space<vmem>>, vector<8x1xi32>
    %22 = arith.index_cast %arg0 : i32 to index
    %23 = memref.load %arg2[%22] : memref<2xi32, #tpu.memory_space<smem>>
    %c0_i32_11 = arith.constant 0 : i32
    %24 = arith.cmpi ne, %23, %c0_i32_11 : i32
    %25 = arith.extui %24 : i1 to i32
    %c0_i32_12 = arith.constant 0 : i32
    %26 = arith.cmpi ne, %25, %c0_i32_12 : i32
    scf.if %26 {
      %c0_i32_15 = arith.constant 0 : i32
      %32 = vector.broadcast %c0_i32_15 : i32 to vector<8x1xi32>
      %33 = arith.maxsi %21, %32 : vector<8x1xi32>
      %34 = tpu.iota {dimensions = array<i32: 1>} : vector<8x8xi32>
      %35 = vector.broadcast %33 : vector<8x1xi32> to vector<8x8xi32>
      %36 = arith.cmpi eq, %34, %35 : vector<8x8xi32>
      %37 = arith.extui %36 : vector<8x8xi1> to vector<8x8xi32>
      %38 = arith.sitofp %37 : vector<8x8xi32> to vector<8x8xf32>
      %c0_16 = arith.constant 0 : index
      %c0_17 = arith.constant 0 : index
      %39 = vector.load %arg4[%c0_16, %c0_17] : memref<8x128xf32, #tpu.memory_space<vmem>>, vector<8x128xf32>
      %cst = arith.constant dense<0.000000e+00> : vector<8x128xf32>
      %40 = tpu.matmul %38, %39, %cst {dimension_numbers = #tpu.dot_dimension_numbers<[1], [0], [0], [1], [0, 0, 1, 1], [], []>} : vector<8x8xf32>, vector<8x128xf32>, vector<8x128xf32> -> vector<8x128xf32>
      %c0_i32_18 = arith.constant 0 : i32
      %41 = vector.broadcast %c0_i32_18 : i32 to vector<8x1xi32>
      %42 = arith.cmpi sge, %21, %41 : vector<8x1xi32>
      %43 = arith.index_cast %9 : i32 to index
      %c0_19 = arith.constant 0 : index
      %c0_20 = arith.constant 0 : index
      %44 = vector.load %arg7[%43, %c0_19, %c0_20] : memref<2x8x128xf32, #tpu.memory_space<vmem>>, vector<1x8x128xf32>
      %45 = vector.shape_cast %44 : vector<1x8x128xf32> to vector<8x128xf32>
      %46 = vector.shape_cast %42 : vector<8x1xi1> to vector<8x1xi1>
      %47 = vector.broadcast %46 : vector<8x1xi1> to vector<8x128xi1>
      %48 = arith.select %47, %40, %45 : vector<8x128xi1>, vector<8x128xf32>
      %c0_21 = arith.constant 0 : index
      %c0_22 = arith.constant 0 : index
      %49 = vector.load %arg6[%c0_21, %c0_22] : memref<8x128xf32, #tpu.memory_space<vmem>>, vector<8x128xf32>
      tpu.vector_store %arg6[%c0_21, %c0_22], %48 {strides = array<i32>} : memref<8x128xf32, #tpu.memory_space<vmem>>, vector<8x128xf32>,
    } else {
    }
    %27 = arith.index_cast %arg0 : i32 to index
    %28 = memref.load %arg2[%27] : memref<2xi32, #tpu.memory_space<smem>>
    %c0_i32_13 = arith.constant 0 : i32
    %29 = arith.cmpi eq, %28, %c0_i32_13 : i32
    %30 = arith.extui %29 : i1 to i32
    %c0_i32_14 = arith.constant 0 : i32
    %31 = arith.cmpi ne, %30, %c0_i32_14 : i32
    scf.if %31 {
      %32 = arith.index_cast %9 : i32 to index
      %c0_15 = arith.constant 0 : index
      %c0_16 = arith.constant 0 : index
      %33 = vector.load %arg7[%32, %c0_15, %c0_16] : memref<2x8x128xf32, #tpu.memory_space<vmem>>, vector<1x8x128xf32>
      %34 = vector.shape_cast %33 : vector<1x8x128xf32> to vector<8x128xf32>
      %c0_17 = arith.constant 0 : index
      %c0_18 = arith.constant 0 : index
      %35 = vector.load %arg6[%c0_17, %c0_18] : memref<8x128xf32, #tpu.memory_space<vmem>>, vector<8x128xf32>
      tpu.vector_store %arg6[%c0_17, %c0_18], %34 {strides = array<i32>} : memref<8x128xf32, #tpu.memory_space<vmem>>, vector<8x128xf32>,
    } else {
    }
    return
  }
  func.func @transform_0(%arg0: i32, %arg1: memref<16xi32, #tpu.memory_space<smem>>, %arg2: memref<2xi32, #tpu.memory_space<smem>>) -> (i32, i32) {
    %c0_i32 = arith.constant 0 : i32
    %c0_i32_0 = arith.constant 0 : i32
    return %arg0, %c0_i32 : i32, i32
  }
  func.func @transform_1(%arg0: i32, %arg1: memref<16xi32, #tpu.memory_space<smem>>, %arg2: memref<2xi32, #tpu.memory_space<smem>>) -> (i32, i32) {
    %c0_i32 = arith.constant 0 : i32
    %c0_i32_0 = arith.constant 0 : i32
    %c0_i32_1 = arith.constant 0 : i32
    return %c0_i32, %c0_i32_0 : i32, i32
  }
  func.func @transform_3(%arg0: i32, %arg1: memref<16xi32, #tpu.memory_space<smem>>, %arg2: memref<2xi32, #tpu.memory_space<smem>>) -> (i32, i32) {
    %c0_i32 = arith.constant 0 : i32
    %c0_i32_0 = arith.constant 0 : i32
    return %arg0, %c0_i32 : i32, i32
  }
}

</mosaic_0001>

<llo_original>
// kernel: tpu_custom_call.1
$region0: #{tpu_custom_call.1}
  #allocation0 [shape = 'u32[]', space=smem, size = 0x4, offset = 0x4, fixed_abs, tag = 'smem constant byte address 0x4 - core index']
  #allocation1 [shape = 'u32[144,128]{1,0:T(1,128)}', space=vmem, size = 0x12000, scoped, tag = 'internal scratch']
  #allocation2 [shape = 'f32[2,8,128]{2,1,0:T(8,128)}', space=vmem, size = 0x2000, scoped, tag = 'scratch operand']
  #allocation3 [shape = 's32[2]{0}', space=sflag, size = 0x8, scoped, tag = 'scratch operand']
  #allocation4 [shape = 's32[1]{0}', space=sflag, size = 0x4, scoped, tag = 'scoped memory for tpu_custom_call.1']
  #allocation5 [shape = 'u8[512]{0}', space=smem, size = 0x200, scoped, tag = 'prefetched SMEM operand 0']
  #allocation6 [shape = 'u8[512]{0}', space=smem, size = 0x200, scoped, tag = 'prefetched SMEM operand 1']
  #allocation9 [shape = 's32[]', space=sflag, size = 0x4, offset = 0, fixed_abs, tag = 'sflag constant byte address 0x0 - dummy sync flag']
  #allocation10 [shape = 's32[]', space=sflag, size = 0x4, offset = 0, fixed_abs, tag = 'sflag constant byte address 0x0 - dummy sync flag']
  #allocation11 [shape = 'u32[]', space=smem, size = 0x4, offset = 0x44, fixed_abs, tag = 'smem constant byte address 0x44 - assertion arg 0']
  #allocation12 [shape = 'u32[]', space=smem, size = 0x4, offset = 0x48, fixed_abs, tag = 'smem constant byte address 0x48 - assertion arg 1']
  #allocation13 [shape = 's32[]', space=sflag, size = 0x4, offset = 0, fixed_abs, tag = 'sflag constant byte address 0x0 - dummy sync flag']
  #allocation14 [shape = 's32[]', space=sflag, size = 0x4, offset = 0, fixed_abs, tag = 'sflag constant byte address 0x0 - dummy sync flag']
  #allocation15 [shape = 's32[]', space=sflag, size = 0x4, offset = 0, fixed_abs, tag = 'sflag constant byte address 0x0 - dummy sync flag']
  #allocation16 [shape = 's32[]', space=sflag, size = 0x4, offset = 0, fixed_abs, tag = 'sflag constant byte address 0x0 - dummy sync flag']
  #allocation17 [shape = 's32[]', space=sflag, size = 0x4, offset = 0, fixed_abs, tag = 'sflag constant byte address 0x0 - dummy sync flag']
  #allocation18 [shape = 's32[]', space=sflag, size = 0x4, offset = 0, fixed_abs, tag = 'sflag constant byte address 0x0 - dummy sync flag']
  #allocation19 [shape = 's32[]', space=sflag, size = 0x4, offset = 0, fixed_abs, tag = 'sflag constant byte address 0x0 - dummy sync flag']
  #allocation20 [shape = 's32[]', space=sflag, size = 0x4, offset = 0, fixed_abs, tag = 'sflag constant byte address 0x0 - dummy sync flag']
  #allocation21 [shape = 's32[]', space=sflag, size = 0x4, offset = 0, fixed_abs, tag = 'sflag constant byte address 0x0 - dummy sync flag']
  #allocation22 [shape = 's32[]', space=sflag, size = 0x4, offset = 0, fixed_abs, tag = 'sflag constant byte address 0x0 - dummy sync flag']
  #allocation23 [shape = 's32[]', space=sflag, size = 0x4, offset = 0, fixed_abs, tag = 'sflag constant byte address 0x0 - dummy sync flag']
  #allocation24 [shape = 's32[]', space=sflag, size = 0x4, offset = 0, fixed_abs, tag = 'sflag constant byte address 0x0 - dummy sync flag']
  #allocation25 [shape = 's32[]', space=sflag, size = 0x4, offset = 0, fixed_abs, tag = 'sflag constant byte address 0x0 - dummy sync flag']
  #allocation26 [shape = 's32[]', space=sflag, size = 0x4, offset = 0, fixed_abs, tag = 'sflag constant byte address 0x0 - dummy sync flag']
  #allocation27 [shape = 's32[]', space=sflag, size = 0x4, offset = 0, fixed_abs, tag = 'sflag constant byte address 0x0 - dummy sync flag']
  #allocation28 [shape = 's32[]', space=sflag, size = 0x4, offset = 0, fixed_abs, tag = 'sflag constant byte address 0x0 - dummy sync flag']
  #allocation29 [shape = 's32[]', space=sflag, size = 0x4, offset = 0, fixed_abs, tag = 'sflag constant byte address 0x0 - dummy sync flag']
  #allocation30 [shape = 's32[]', space=sflag, size = 0x4, offset = 0, fixed_abs, tag = 'sflag constant byte address 0x0 - dummy sync flag']
  #allocation31 [shape = 's32[]', space=sflag, size = 0x4, offset = 0, fixed_abs, tag = 'sflag constant byte address 0x0 - dummy sync flag']
  #allocation32 [shape = 's32[]', space=sflag, size = 0x4, offset = 0, fixed_abs, tag = 'sflag constant byte address 0x0 - dummy sync flag']
  #allocation33 [shape = 's32[]', space=sflag, size = 0x4, offset = 0, fixed_abs, tag = 'sflag constant byte address 0x0 - dummy sync flag']
  #allocation34 [shape = 's32[]', space=sflag, size = 0x4, offset = 0, fixed_abs, tag = 'sflag constant byte address 0x0 - dummy sync flag']
  #allocation35 [shape = 's32[]', space=sflag, size = 0x4, offset = 0, fixed_abs, tag = 'sflag constant byte address 0x0 - dummy sync flag']
  #allocation36 [shape = 's32[]', space=sflag, size = 0x4, offset = 0, fixed_abs, tag = 'sflag constant byte address 0x0 - dummy sync flag']
  #allocation37 [shape = 's32[]', space=sflag, size = 0x4, offset = 0, fixed_abs, tag = 'sflag constant byte address 0x0 - dummy sync flag']
  #allocation38 [shape = 's32[]', space=sflag, size = 0x4, offset = 0, fixed_abs, tag = 'sflag constant byte address 0x0 - dummy sync flag']
  #allocation39 [shape = 's32[]', space=sflag, size = 0x4, offset = 0, fixed_abs, tag = 'sflag constant byte address 0x0 - dummy sync flag']
  #allocation40 [shape = 's32[]', space=sflag, size = 0x4, offset = 0, fixed_abs, tag = 'sflag constant byte address 0x0 - dummy sync flag']
  #allocation41 [shape = 's32[]', space=sflag, size = 0x4, offset = 0, fixed_abs, tag = 'sflag constant byte address 0x0 - dummy sync flag']
  #allocation42 [shape = 's32[]', space=sflag, size = 0x4, offset = 0, fixed_abs, tag = 'sflag constant byte address 0x0 - dummy sync flag']
  %s0 = inlined_call_operand.vmem [shape: s32[16], index: 0, kind: input, shape index: {}]
  %s1 = inlined_call_operand.vmem [shape: s32[2], index: 1, kind: input, shape index: {}]
  %s2 = inlined_call_operand.vmem [shape: s32[16,1], index: 2, kind: input, shape index: {}]
  %s3 = inlined_call_operand.vmem [shape: f32[8,128], index: 3, kind: input, shape index: {}]
  %s4 = inlined_call_operand.hbm [shape: f32[64,128], index: 4, kind: input, shape index: {}]
  %s5 = inlined_call_operand.hbm [shape: f32[16,128], index: 5, kind: output, shape index: {}]
  %s6 = sld [smem:[#allocation0]]
  $region121: #{tpu_custom_call.1} parent=0
    _
  %s8 = ssub.s32 1, %s6
  %s9 = scalar_select 0, %s8, %s6
  %s10 = sshll.u32 %s0, 4
  %s11 = int_to_ptr.vmem [resolvable:$true] %s10
  %13 = dma.vmem_to_smem %s11, 16, [#allocation5], [#allocation4]
  %s14 = sshll.u32 %s1, 4
  %s15 = int_to_ptr.vmem [resolvable:$true] %s14
  %17 = dma.vmem_to_smem %s15, 16, [#allocation6], [#allocation4]
  %18 = dma.done [#allocation4], 32
  %19 = sfence
  $region1: #{tpu_custom_call.1} parent=0
    #allocation7 [shape = 'u8[8192]{0}', space=vmem, size = 0x2000, scoped, tag = 'output window, operand 0']
    #allocation8 [shape = 's32[2]{0}', space=sflag, size = 0x8, scoped, tag = 'scoped memory for tpu_custom_call.1']
    %20 = vsyncpa [#allocation8], 0
    %s21 = scalar_lea.sflag [#allocation8], 1
    %22 = vsyncpa %s21, 0
    loop: start=0, step=1, limit=4
    $region2: #{tpu_custom_call.1} parent=1 // loop_pre_header
      _
    $region3: #{tpu_custom_call.1} parent=1 // loop_header
      %s24 = sphi 0, %s28
      %p25 = scmp.ge.s32.totalorder %s24, 4
      %s34 = sphi 0, %s36
      %s37 = sphi 0, %s34
      %s38 = sphi 0, %s37
      %s54 = sphi 0, %s38
      %s58 = sphi 0, %s58
      %s60 = sphi 0, %s58
      %s61 = sphi 0, %s60
      %s75 = sphi 0, %s61
      %s81 = sphi 0, %s83
      %s84 = sphi 0, %s81
      %s85 = sphi 0, %s84
      %s101 = sphi 0, %s85
    $region4: #{tpu_custom_call.1} parent=1 // loop_header_branch
      %27 = sbr.rel (%p25) target = $region8
    $region5: #{tpu_custom_call.1} parent=1 // loop_body
      %s29 = ssub.s32 %s24, 1
      %s30 = ssub.s32 %s24, 2
      %s31 = sadd.s32 %s24, 1
      %s32 = ssub.s32 %s24, %s31
      %p33 = scmp.eq.s32.totalorder %s32, 0
      %s35 = sadd.s32 %s34, 1
      %s36 = scalar_select %p33, %s34, %s35
      %p39 = pneg %p33
      %p40 = scmp.eq.s32.totalorder %s24, 1
      %p41 = por %p39, %p40
      %p42 = scmp.ne.s32.totalorder %s34, %s37
      %p43 = scmp.eq.s32.totalorder %s24, 0
      %p44 = por %p42, %p43
      %p45 = scmp.ne.s32.totalorder %s34, %s37
      %p46 = scmp.eq.s32.totalorder %s29, 1
      %p47 = por %p45, %p46
      %p48 = scmp.ne.s32.totalorder %s37, %s38
      %p49 = scmp.eq.s32.totalorder %s29, 0
      %p50 = por %p48, %p49
      %p51 = scmp.ne.s32.totalorder %s37, %s38
      %p52 = scmp.eq.s32.totalorder %s30, 1
      %p53 = por %p51, %p52
      %p55 = scmp.ne.s32.totalorder %s38, %s54
      %p56 = scmp.eq.s32.totalorder %s30, 0
      %p57 = por %p55, %p56
      %s59 = sadd.s32 %s58, 1
      %p62 = scmp.eq.s32.totalorder %s24, 1
      %p63 = scmp.ne.s32.totalorder %s58, %s60
      %p64 = scmp.eq.s32.totalorder %s24, 0
      %p65 = por %p63, %p64
      %p66 = scmp.ne.s32.totalorder %s58, %s60
      %p67 = scmp.eq.s32.totalorder %s29, 1
      %p68 = por %p66, %p67
      %p69 = scmp.ne.s32.totalorder %s60, %s61
      %p70 = scmp.eq.s32.totalorder %s29, 0
      %p71 = por %p69, %p70
      %p72 = scmp.ne.s32.totalorder %s60, %s61
      %p73 = scmp.eq.s32.totalorder %s30, 1
      %p74 = por %p72, %p73
      %p76 = scmp.ne.s32.totalorder %s61, %s75
      %p77 = scmp.eq.s32.totalorder %s30, 0
      %p78 = por %p76, %p77
      %s79 = ssub.s32 %s24, %s31
      %p80 = scmp.eq.s32.totalorder %s79, 0
      %s82 = sadd.s32 %s81, 1
      %s83 = scalar_select %p80, %s81, %s82
      %p86 = pneg %p80
      %p87 = scmp.eq.s32.totalorder %s24, 1
      %p88 = por %p86, %p87
      %p89 = scmp.ne.s32.totalorder %s81, %s84
      %p90 = scmp.eq.s32.totalorder %s24, 0
      %p91 = por %p89, %p90
      %p92 = scmp.ne.s32.totalorder %s81, %s84
      %p93 = scmp.eq.s32.totalorder %s29, 1
      %p94 = por %p92, %p93
      %p95 = scmp.ne.s32.totalorder %s84, %s85
      %p96 = scmp.eq.s32.totalorder %s29, 0
      %p97 = por %p95, %p96
      %p98 = scmp.ne.s32.totalorder %s84, %s85
      %p99 = scmp.eq.s32.totalorder %s30, 1
      %p100 = por %p98, %p99
      %p102 = scmp.ne.s32.totalorder %s85, %s101
      %p103 = scmp.eq.s32.totalorder %s30, 0
      %p104 = por %p102, %p103
      %p105 = scmp.le.s32.totalorder 1, %s24
      %p106 = scmp.lt.s32.totalorder %s24, 3
      %p107 = pnand %p105, %p106
      %p108 = pneg %p107
      // Predicated region
      $region9: #{tpu_custom_call.1} parent=5 // pred_check
        _
      $region10: #{tpu_custom_call.1} parent=5 // pred_check_branch
        %110 = sbr.rel (%p107) target = $region12
      $region11: #{tpu_custom_call.1} parent=5 // pred_region
        %s111 = ssub.s32 %s24, 1
        // Predicated region
        $region13: #{tpu_custom_call.1} parent=11 // pred_check
          %p112 = pneg %p71
        $region14: #{tpu_custom_call.1} parent=11 // pred_check_branch
          %114 = sbr.rel (%p112) target = $region16
        $region15: #{tpu_custom_call.1} parent=11 // pred_region
          _
        $region16: #{tpu_custom_call.1} parent=11 // pred_fallthru
          _
      $region12: #{tpu_custom_call.1} parent=5 // pred_fallthru
        _
      %p115 = scmp.lt.s32.totalorder %s24, 2
      // Predicated region
      $region17: #{tpu_custom_call.1} parent=5 // pred_check
        %p116 = pneg %p115
      $region18: #{tpu_custom_call.1} parent=5 // pred_check_branch
        %118 = sbr.rel (%p116) target = $region20
      $region19: #{tpu_custom_call.1} parent=5 // pred_region
        // Predicated region
        $region21: #{tpu_custom_call.1} parent=19 // pred_check
          %p119 = pneg %p44
        $region22: #{tpu_custom_call.1} parent=19 // pred_check_branch
          %121 = sbr.rel (%p119) target = $region24
        $region23: #{tpu_custom_call.1} parent=19 // pred_region
          %p122 = scmp.lt.s32.totalorder %s24, 1
          %s123 = scalar_select %p122, %s24, 1
          %s124 = smul.addr %s123, 8
          %s125 = scalar_lea.vmem %s2, %s124
        $region24: #{tpu_custom_call.1} parent=19 // pred_fallthru
          _
      $region20: #{tpu_custom_call.1} parent=5 // pred_fallthru
        _
      %p126 = scmp.le.s32.totalorder 1, %s24
      %p127 = scmp.lt.s32.totalorder %s24, 3
      %p128 = pnand %p126, %p127
      %p129 = pneg %p128
      // Predicated region
      $region25: #{tpu_custom_call.1} parent=5 // pred_check
        _
      $region26: #{tpu_custom_call.1} parent=5 // pred_check_branch
        %131 = sbr.rel (%p128) target = $region28
      $region27: #{tpu_custom_call.1} parent=5 // pred_region
        %s132 = ssub.s32 %s24, 1
        %p133 = scmp.lt.s32.totalorder %s29, 1
        %s134 = scalar_select %p133, %s29, 1
        %s135 = smul.addr %s134, 8
        %s136 = scalar_lea.vmem %s2, %s135
        %p137 = pneg %p50
        %p138 = pneg %p47
        %p139 = pneg %p71
        %p140 = pneg %p68
        %p141 = pneg %p97
        %p142 = pneg %p94
        %s143 = sand.u32 %s84, 1
        %s144 = scalar_lea.sflag [#allocation8], %s143
        %s145 = sand.u32 %s84, 1
        %s146 = smul.addr %s145, 8
        %s147 = scalar_lea.vmem [#allocation7], %s146
        %p148 = scmp.lt.s32.totalorder %s29, 1
        %s149 = scalar_select %p148, %s29, 1
        %s150 = smul.addr %s149, 8
        %s151 = scalar_lea.vmem %s2, %s150
        %p152 = scmp.lt.s32.totalorder %s29, 0
        %s153 = ssub.s32 0, %s29
        %s154 = scalar_select %p152, %s153, %s29
        %s155 = sand.u32 %s154, 1
        %s156 = ssub.s32 0, %s155
        %s157 = scalar_select %p152, %s156, %s155
        %p158 = scmp.ne.s32.totalorder %s157, 0
        %p159 = scmp.lt.s32.totalorder %s157, 0
        %p160 = pnand %p159, %p158
        %p161 = pneg %p160
        %s162 = sadd.s32 %s157, 2
        %s163 = scalar_select %p161, %s162, %s157
        %p164 = scmp.eq.s32.totalorder %s29, 0
        // Predicated region
        $region29: #{tpu_custom_call.1} parent=27 // pred_check
          %p165 = pneg %p164
        $region30: #{tpu_custom_call.1} parent=27 // pred_check_branch
          %167 = sbr.rel (%p165) target = $region32
        $region31: #{tpu_custom_call.1} parent=27 // pred_region
          %s168 = sld [smem:[#allocation5]]
          %s169 = smul.addr %s168, 16
          %s170 = scalar_lea.hbm %s4, %s169
          // Predicated region
          $region33: #{tpu_custom_call.1} parent=31 // pred_check
            _
          $region34: #{tpu_custom_call.1} parent=31 // pred_check_branch
            %172 = sbr.rel target = $region36
          $region35: #{tpu_custom_call.1} parent=31 // pred_region
            %173 = sst [smem:[#allocation11]] [#allocation10]
            %174 = sst [smem:[#allocation12]] [#allocation9]
          $region36: #{tpu_custom_call.1} parent=31 // pred_fallthru
            _
          %176 = shalt.err (0)
          %s178 = sshll.u32 [#allocation2], 4
          %s179 = int_to_ptr.vmem [resolvable:$true] %s178
          %181 = dma.hbm_to_vmem [thread:$0]  %s170, 16, %s179, [#allocation3]
          %s182 = sld [smem:[#allocation5 + $0x1]]
          %s183 = smul.addr %s182, 16
          %s184 = scalar_lea.hbm %s4, %s183
          %s185 = scalar_lea.vmem [#allocation2], 1
          // Predicated region
          $region37: #{tpu_custom_call.1} parent=31 // pred_check
            _
          $region38: #{tpu_custom_call.1} parent=31 // pred_check_branch
            %187 = sbr.rel target = $region40
          $region39: #{tpu_custom_call.1} parent=31 // pred_region
            %188 = sst [smem:[#allocation11]] [#allocation14]
            %189 = sst [smem:[#allocation12]] [#allocation13]
          $region40: #{tpu_custom_call.1} parent=31 // pred_fallthru
            _
          %191 = shalt.err (0)
          %s193 = sshll.u32 %s185, 4
          %s194 = int_to_ptr.vmem [resolvable:$true] %s193
          %196 = dma.hbm_to_vmem [thread:$0]  %s184, 16, %s194, [#allocation3]
          %s197 = sld [smem:[#allocation5 + $0x2]]
          %s198 = smul.addr %s197, 16
          %s199 = scalar_lea.hbm %s4, %s198
          %s200 = scalar_lea.vmem [#allocation2], 2
          // Predicated region
          $region41: #{tpu_custom_call.1} parent=31 // pred_check
            _
          $region42: #{tpu_custom_call.1} parent=31 // pred_check_branch
            %202 = sbr.rel target = $region44
          $region43: #{tpu_custom_call.1} parent=31 // pred_region
            %203 = sst [smem:[#allocation11]] [#allocation16]
            %204 = sst [smem:[#allocation12]] [#allocation15]
          $region44: #{tpu_custom_call.1} parent=31 // pred_fallthru
            _
          %206 = shalt.err (0)
          %s208 = sshll.u32 %s200, 4
          %s209 = int_to_ptr.vmem [resolvable:$true] %s208
          %211 = dma.hbm_to_vmem [thread:$0]  %s199, 16, %s209, [#allocation3]
          %s212 = sld [smem:[#allocation5 + $0x3]]
          %s213 = smul.addr %s212, 16
          %s214 = scalar_lea.hbm %s4, %s213
          %s215 = scalar_lea.vmem [#allocation2], 3
          // Predicated region
          $region45: #{tpu_custom_call.1} parent=31 // pred_check
            _
          $region46: #{tpu_custom_call.1} parent=31 // pred_check_branch
            %217 = sbr.rel target = $region48
          $region47: #{tpu_custom_call.1} parent=31 // pred_region
            %218 = sst [smem:[#allocation11]] [#allocation18]
            %219 = sst [smem:[#allocation12]] [#allocation17]
          $region48: #{tpu_custom_call.1} parent=31 // pred_fallthru
            _
          %221 = shalt.err (0)
          %s223 = sshll.u32 %s215, 4
          %s224 = int_to_ptr.vmem [resolvable:$true] %s223
          %226 = dma.hbm_to_vmem [thread:$0]  %s214, 16, %s224, [#allocation3]
          %s227 = sld [smem:[#allocation5 + $0x4]]
          %s228 = smul.addr %s227, 16
          %s229 = scalar_lea.hbm %s4, %s228
          %s230 = scalar_lea.vmem [#allocation2], 4
          // Predicated region
          $region49: #{tpu_custom_call.1} parent=31 // pred_check
            _
          $region50: #{tpu_custom_call.1} parent=31 // pred_check_branch
            %232 = sbr.rel target = $region52
          $region51: #{tpu_custom_call.1} parent=31 // pred_region
            %233 = sst [smem:[#allocation11]] [#allocation20]
            %234 = sst [smem:[#allocation12]] [#allocation19]
          $region52: #{tpu_custom_call.1} parent=31 // pred_fallthru
            _
          %236 = shalt.err (0)
          %s238 = sshll.u32 %s230, 4
          %s239 = int_to_ptr.vmem [resolvable:$true] %s238
          %241 = dma.hbm_to_vmem [thread:$0]  %s229, 16, %s239, [#allocation3]
          %s242 = sld [smem:[#allocation5 + $0x5]]
          %s243 = smul.addr %s242, 16
          %s244 = scalar_lea.hbm %s4, %s243
          %s245 = scalar_lea.vmem [#allocation2], 5
          // Predicated region
          $region53: #{tpu_custom_call.1} parent=31 // pred_check
            _
          $region54: #{tpu_custom_call.1} parent=31 // pred_check_branch
            %247 = sbr.rel target = $region56
          $region55: #{tpu_custom_call.1} parent=31 // pred_region
            %248 = sst [smem:[#allocation11]] [#allocation22]
            %249 = sst [smem:[#allocation12]] [#allocation21]
          $region56: #{tpu_custom_call.1} parent=31 // pred_fallthru
            _
          %251 = shalt.err (0)
          %s253 = sshll.u32 %s245, 4
          %s254 = int_to_ptr.vmem [resolvable:$true] %s253
          %256 = dma.hbm_to_vmem [thread:$0]  %s244, 16, %s254, [#allocation3]
          %s257 = sld [smem:[#allocation5 + $0x6]]
          %s258 = smul.addr %s257, 16
          %s259 = scalar_lea.hbm %s4, %s258
          %s260 = scalar_lea.vmem [#allocation2], 6
          // Predicated region
          $region57: #{tpu_custom_call.1} parent=31 // pred_check
            _
          $region58: #{tpu_custom_call.1} parent=31 // pred_check_branch
            %262 = sbr.rel target = $region60
          $region59: #{tpu_custom_call.1} parent=31 // pred_region
            %263 = sst [smem:[#allocation11]] [#allocation24]
            %264 = sst [smem:[#allocation12]] [#allocation23]
          $region60: #{tpu_custom_call.1} parent=31 // pred_fallthru
            _
          %266 = shalt.err (0)
          %s268 = sshll.u32 %s260, 4
          %s269 = int_to_ptr.vmem [resolvable:$true] %s268
          %271 = dma.hbm_to_vmem [thread:$0]  %s259, 16, %s269, [#allocation3]
          %s272 = sld [smem:[#allocation5 + $0x7]]
          %s273 = smul.addr %s272, 16
          %s274 = scalar_lea.hbm %s4, %s273
          %s275 = scalar_lea.vmem [#allocation2], 7
          // Predicated region
          $region61: #{tpu_custom_call.1} parent=31 // pred_check
            _
          $region62: #{tpu_custom_call.1} parent=31 // pred_check_branch
            %277 = sbr.rel target = $region64
          $region63: #{tpu_custom_call.1} parent=31 // pred_region
            %278 = sst [smem:[#allocation11]] [#allocation26]
            %279 = sst [smem:[#allocation12]] [#allocation25]
          $region64: #{tpu_custom_call.1} parent=31 // pred_fallthru
            _
          %281 = shalt.err (0)
          %s283 = sshll.u32 %s275, 4
          %s284 = int_to_ptr.vmem [resolvable:$true] %s283
          %286 = dma.hbm_to_vmem [thread:$0]  %s274, 16, %s284, [#allocation3]
        $region32: #{tpu_custom_call.1} parent=27 // pred_fallthru
          _
        %s287 = sadd.s32 %s29, 1
        %p288 = scmp.lt.s32.totalorder %s287, 2
        // Predicated region
        $region65: #{tpu_custom_call.1} parent=27 // pred_check
          %p289 = pneg %p288
        $region66: #{tpu_custom_call.1} parent=27 // pred_check_branch
          %291 = sbr.rel (%p289) target = $region68
        $region67: #{tpu_custom_call.1} parent=27 // pred_region
          %p292 = scmp.lt.s32.totalorder %s287, 0
          %s293 = ssub.s32 0, %s287
          %s294 = scalar_select %p292, %s293, %s287
          %s295 = sand.u32 %s294, 1
          %s296 = ssub.s32 0, %s295
          %s297 = scalar_select %p292, %s296, %s295
          %p298 = scmp.ne.s32.totalorder %s297, 0
          %p299 = scmp.lt.s32.totalorder %s297, 0
          %p300 = pnand %p299, %p298
          %p301 = pneg %p300
          %s302 = sadd.s32 %s297, 2
          %s303 = scalar_select %p301, %s302, %s297
          %s304 = smul.u32 %s287, 8
          %s305 = sld [smem:[#allocation5 + %s304]]
          %s306 = smul.addr %s305, 16
          %s307 = scalar_lea.hbm %s4, %s306
          %s308 = smul.u32 %s303, 8
          %s309 = scalar_lea.vmem [#allocation2], %s308
          %s310 = scalar_lea.sflag [#allocation3], %s303
          // Predicated region
          $region69: #{tpu_custom_call.1} parent=67 // pred_check
            _
          $region70: #{tpu_custom_call.1} parent=67 // pred_check_branch
            %312 = sbr.rel target = $region72
          $region71: #{tpu_custom_call.1} parent=67 // pred_region
            %313 = sst [smem:[#allocation11]] [#allocation28]
            %314 = sst [smem:[#allocation12]] [#allocation27]
          $region72: #{tpu_custom_call.1} parent=67 // pred_fallthru
            _
          %316 = shalt.err (0)
          %s318 = sshll.u32 %s309, 4
          %s319 = int_to_ptr.vmem [resolvable:$true] %s318
          %321 = dma.hbm_to_vmem [thread:$0]  %s307, 16, %s319, %s310
          %s322 = sadd.s32 %s304, 1
          %s323 = sld [smem:[#allocation5 + %s322]]
          %s324 = smul.addr %s323, 16
          %s325 = scalar_lea.hbm %s4, %s324
          %s326 = sadd.s32 1, %s308
          %s327 = scalar_lea.vmem [#allocation2], %s326
          // Predicated region
          $region73: #{tpu_custom_call.1} parent=67 // pred_check
            _
          $region74: #{tpu_custom_call.1} parent=67 // pred_check_branch
            %329 = sbr.rel target = $region76
          $region75: #{tpu_custom_call.1} parent=67 // pred_region
            %330 = sst [smem:[#allocation11]] [#allocation30]
            %331 = sst [smem:[#allocation12]] [#allocation29]
          $region76: #{tpu_custom_call.1} parent=67 // pred_fallthru
            _
          %333 = shalt.err (0)
          %s335 = sshll.u32 %s327, 4
          %s336 = int_to_ptr.vmem [resolvable:$true] %s335
          %338 = dma.hbm_to_vmem [thread:$0]  %s325, 16, %s336, %s310
          %s339 = sadd.s32 %s304, 2
          %s340 = sld [smem:[#allocation5 + %s339]]
          %s341 = smul.addr %s340, 16
          %s342 = scalar_lea.hbm %s4, %s341
          %s343 = sadd.s32 2, %s308
          %s344 = scalar_lea.vmem [#allocation2], %s343
          // Predicated region
          $region77: #{tpu_custom_call.1} parent=67 // pred_check
            _
          $region78: #{tpu_custom_call.1} parent=67 // pred_check_branch
            %346 = sbr.rel target = $region80
          $region79: #{tpu_custom_call.1} parent=67 // pred_region
            %347 = sst [smem:[#allocation11]] [#allocation32]
            %348 = sst [smem:[#allocation12]] [#allocation31]
          $region80: #{tpu_custom_call.1} parent=67 // pred_fallthru
            _
          %350 = shalt.err (0)
          %s352 = sshll.u32 %s344, 4
          %s353 = int_to_ptr.vmem [resolvable:$true] %s352
          %355 = dma.hbm_to_vmem [thread:$0]  %s342, 16, %s353, %s310
          %s356 = sadd.s32 %s304, 3
          %s357 = sld [smem:[#allocation5 + %s356]]
          %s358 = smul.addr %s357, 16
          %s359 = scalar_lea.hbm %s4, %s358
          %s360 = sadd.s32 3, %s308
          %s361 = scalar_lea.vmem [#allocation2], %s360
          // Predicated region
          $region81: #{tpu_custom_call.1} parent=67 // pred_check
            _
          $region82: #{tpu_custom_call.1} parent=67 // pred_check_branch
            %363 = sbr.rel target = $region84
          $region83: #{tpu_custom_call.1} parent=67 // pred_region
            %364 = sst [smem:[#allocation11]] [#allocation34]
            %365 = sst [smem:[#allocation12]] [#allocation33]
          $region84: #{tpu_custom_call.1} parent=67 // pred_fallthru
            _
          %367 = shalt.err (0)
          %s369 = sshll.u32 %s361, 4
          %s370 = int_to_ptr.vmem [resolvable:$true] %s369
          %372 = dma.hbm_to_vmem [thread:$0]  %s359, 16, %s370, %s310
          %s373 = sadd.s32 %s304, 4
          %s374 = sld [smem:[#allocation5 + %s373]]
          %s375 = smul.addr %s374, 16
          %s376 = scalar_lea.hbm %s4, %s375
          %s377 = sadd.s32 4, %s308
          %s378 = scalar_lea.vmem [#allocation2], %s377
          // Predicated region
          $region85: #{tpu_custom_call.1} parent=67 // pred_check
            _
          $region86: #{tpu_custom_call.1} parent=67 // pred_check_branch
            %380 = sbr.rel target = $region88
          $region87: #{tpu_custom_call.1} parent=67 // pred_region
            %381 = sst [smem:[#allocation11]] [#allocation36]
            %382 = sst [smem:[#allocation12]] [#allocation35]
          $region88: #{tpu_custom_call.1} parent=67 // pred_fallthru
            _
          %384 = shalt.err (0)
          %s386 = sshll.u32 %s378, 4
          %s387 = int_to_ptr.vmem [resolvable:$true] %s386
          %389 = dma.hbm_to_vmem [thread:$0]  %s376, 16, %s387, %s310
          %s390 = sadd.s32 %s304, 5
          %s391 = sld [smem:[#allocation5 + %s390]]
          %s392 = smul.addr %s391, 16
          %s393 = scalar_lea.hbm %s4, %s392
          %s394 = sadd.s32 5, %s308
          %s395 = scalar_lea.vmem [#allocation2], %s394
          // Predicated region
          $region89: #{tpu_custom_call.1} parent=67 // pred_check
            _
          $region90: #{tpu_custom_call.1} parent=67 // pred_check_branch
            %397 = sbr.rel target = $region92
          $region91: #{tpu_custom_call.1} parent=67 // pred_region
            %398 = sst [smem:[#allocation11]] [#allocation38]
            %399 = sst [smem:[#allocation12]] [#allocation37]
          $region92: #{tpu_custom_call.1} parent=67 // pred_fallthru
            _
          %401 = shalt.err (0)
          %s403 = sshll.u32 %s395, 4
          %s404 = int_to_ptr.vmem [resolvable:$true] %s403
          %406 = dma.hbm_to_vmem [thread:$0]  %s393, 16, %s404, %s310
          %s407 = sadd.s32 %s304, 6
          %s408 = sld [smem:[#allocation5 + %s407]]
          %s409 = smul.addr %s408, 16
          %s410 = scalar_lea.hbm %s4, %s409
          %s411 = sadd.s32 6, %s308
          %s412 = scalar_lea.vmem [#allocation2], %s411
          // Predicated region
          $region93: #{tpu_custom_call.1} parent=67 // pred_check
            _
          $region94: #{tpu_custom_call.1} parent=67 // pred_check_branch
            %414 = sbr.rel target = $region96
          $region95: #{tpu_custom_call.1} parent=67 // pred_region
            %415 = sst [smem:[#allocation11]] [#allocation40]
            %416 = sst [smem:[#allocation12]] [#allocation39]
          $region96: #{tpu_custom_call.1} parent=67 // pred_fallthru
            _
          %418 = shalt.err (0)
          %s420 = sshll.u32 %s412, 4
          %s421 = int_to_ptr.vmem [resolvable:$true] %s420
          %423 = dma.hbm_to_vmem [thread:$0]  %s410, 16, %s421, %s310
          %s424 = sadd.s32 %s304, 7
          %s425 = sld [smem:[#allocation5 + %s424]]
          %s426 = smul.addr %s425, 16
          %s427 = scalar_lea.hbm %s4, %s426
          %s428 = sadd.s32 7, %s308
          %s429 = scalar_lea.vmem [#allocation2], %s428
          // Predicated region
          $region97: #{tpu_custom_call.1} parent=67 // pred_check
            _
          $region98: #{tpu_custom_call.1} parent=67 // pred_check_branch
            %431 = sbr.rel target = $region100
          $region99: #{tpu_custom_call.1} parent=67 // pred_region
            %432 = sst [smem:[#allocation11]] [#allocation42]
            %433 = sst [smem:[#allocation12]] [#allocation41]
          $region100: #{tpu_custom_call.1} parent=67 // pred_fallthru
            _
          %435 = shalt.err (0)
          %s437 = sshll.u32 %s429, 4
          %s438 = int_to_ptr.vmem [resolvable:$true] %s437
          %440 = dma.hbm_to_vmem [thread:$0]  %s427, 16, %s438, %s310
        $region68: #{tpu_custom_call.1} parent=27 // pred_fallthru
          _
        %s441 = smul.u32 %s163, 8
        %s442 = scalar_lea.vmem [#allocation2], %s441
        %s443 = scalar_lea.sflag [#allocation3], %s163
        %s444 = smul.u32 8, 1
        %s445 = sshll.u32 %s444, 4
        %446 = dma.done %s443, %s445
        %v447 = vld [vmem:[%s151] sm:$0xff]
        %s448 = sld [smem:[#allocation6 + %s29]]
        %p449 = scmp.ne.s32.totalorder %s448, 0
        // Predicated region
        $region101: #{tpu_custom_call.1} parent=27 // pred_check
          %p450 = pneg %p449
        $region102: #{tpu_custom_call.1} parent=27 // pred_check_branch
          %452 = sbr.rel (%p450) target = $region104
        $region103: #{tpu_custom_call.1} parent=27 // pred_region
          %vm453 = vcmp.gt.s32.totalorder %v447, 0
          %v454 = vsel %vm453, %v447, 0
          %v455 = vlaneseq
          %v456 = vand.u32 %v455, 127
          %457 = vset.pattern.permute.xlu0 0
          %458 = vperm.xlu0 %457, %v454
          %v459 = vpop.permute.xlu0 %458
          %vm460 = vcmp.eq.s32.totalorder %v456, %v459
          %v461 = vsel %vm460, 1, 0
          %v462 = vcvt.s32.f32 %v461
          %v463 = vld [vmem:[%s3] sm:$0xff]
          %vm464 = vcmask 64512
          %v466 = vsel %vm464, %v462, 0
          %468 = vmatprep.subr.mxu0 0.0
          %469 = vmatpush1.msra.mxu0 0.0
          %470 = vmatprep.subr.mxu0 0.0
          %471 = vmatpush1.msra.mxu0 0.0
          %472 = vmatprep.subr.mxu0 0.0
          %473 = vmatpush1.msra.mxu0 0.0
          %474 = vmatprep.subr.mxu0 0.0
          %475 = vmatpush1.msra.mxu0 0.0
          %476 = vmatprep.subr.mxu0 0.0
          %477 = vmatpush1.msra.mxu0 0.0
          %478 = vmatprep.subr.mxu0 0.0
          %479 = vmatpush1.msra.mxu0 0.0
          %480 = vmatprep.subr.mxu0 0.0
          %481 = vmatpush1.msra.mxu0 0.0
          %482 = vmatprep.subr.mxu0 0.0
          %483 = vmatpush1.msra.mxu0 0.0
          %484 = vmatprep.subr.mxu0 0.0
          %485 = vmatpush1.msra.mxu0 0.0
          %486 = vmatprep.subr.mxu0 0.0
          %487 = vmatpush1.msra.mxu0 0.0
          %488 = vmatprep.subr.mxu0 0.0
          %489 = vmatpush1.msra.mxu0 0.0
          %490 = vmatprep.subr.mxu0 0.0
          %491 = vmatpush1.msra.mxu0 0.0
          %492 = vmatprep.subr.mxu0 0.0
          %493 = vmatpush1.msra.mxu0 0.0
          %494 = vmatprep.subr.mxu0 0.0
          %495 = vmatpush1.msra.mxu0 0.0
          %496 = vmatprep.subr.mxu0 0.0
          %497 = vmatpush1.msra.mxu0 0.0
          %498 = vmatprep.subr.mxu0 0.0
          %499 = vmatpush1.msra.mxu0 %v463
          %500 = vmatprep.subr.mxu0 0.0
          %501 = vmatpush2.msra.mxu0 0.0
          %502 = vmatprep.subr.mxu0 0.0
          %503 = vmatpush2.msra.mxu0 0.0
          %504 = vmatprep.subr.mxu0 0.0
          %505 = vmatpush2.msra.mxu0 0.0
          %506 = vmatprep.subr.mxu0 0.0
          %507 = vmatpush2.msra.mxu0 0.0
          %508 = vmatprep.subr.mxu0 0.0
          %509 = vmatpush2.msra.mxu0 0.0
          %510 = vmatprep.subr.mxu0 0.0
          %511 = vmatpush2.msra.mxu0 0.0
          %512 = vmatprep.subr.mxu0 0.0
          %513 = vmatpush2.msra.mxu0 0.0
          %514 = vmatprep.subr.mxu0 0.0
          %515 = vmatpush2.msra.mxu0 0.0
          %516 = vmatprep.subr.mxu0 0.0
          %517 = vmatpush2.msra.mxu0 0.0
          %518 = vmatprep.subr.mxu0 0.0
          %519 = vmatpush2.msra.mxu0 0.0
          %520 = vmatprep.subr.mxu0 0.0
          %521 = vmatpush2.msra.mxu0 0.0
          %522 = vmatprep.subr.mxu0 0.0
          %523 = vmatpush2.msra.mxu0 0.0
          %524 = vmatprep.subr.mxu0 0.0
          %525 = vmatpush2.msra.mxu0 0.0
          %526 = vmatprep.subr.mxu0 0.0
          %527 = vmatpush2.msra.mxu0 0.0
          %528 = vmatprep.subr.mxu0 0.0
          %529 = vmatpush2.msra.mxu0 0.0
          %530 = vmatprep.subr.mxu0 0.0
          %531 = vmatpush2.msra.mxu0 0.0
          %532 = vmatprep.mubr.f32.mxu0 0.0
          %533 = vmatmul.mubr.f32.gmra.mxu0 %v466
          %v534 = vpop.f32.mrf.mxu0
          %v535 = vadd.f32 0.0, %v534
          %v536 = vpop.f32.mrf.mxu0
          %537 = vdwg.mxu0
          %vm538 = vcmp.ge.s32.totalorder %v447, 0
          %v539 = vld [vmem:[%s442] sm:$0xff]
          %v540 = vsel %vm538, 1, 0
          %541 = vset.pattern.permute.xlu0 0
          %542 = vperm.xlu0 %541, %v540
          %v543 = vpop.permute.xlu0 %542
          %vm544 = vcmp.eq.s32.totalorder %v543, 1
          %v545 = vsel %vm544, %v535, %v539
          %546 = vst [vmem:[%s147] sm:$0xff] %v545
        $region104: #{tpu_custom_call.1} parent=27 // pred_fallthru
          _
        %s547 = sld [smem:[#allocation6 + %s29]]
        %p548 = scmp.eq.s32.totalorder %s547, 0
        // Predicated region
        $region105: #{tpu_custom_call.1} parent=27 // pred_check
          %p549 = pneg %p548
        $region106: #{tpu_custom_call.1} parent=27 // pred_check_branch
          %551 = sbr.rel (%p549) target = $region108
        $region107: #{tpu_custom_call.1} parent=27 // pred_region
          %v552 = vld [vmem:[%s442] sm:$0xff]
          %553 = vst [vmem:[%s147] sm:$0xff] %v552
        $region108: #{tpu_custom_call.1} parent=27 // pred_fallthru
          _
        %s554 = sand.u32 %s84, 1
        %s555 = scalar_lea.sflag [#allocation8], %s554
        %s556 = sand.u32 %s84, 1
        %s557 = smul.addr %s556, 8
        %s558 = scalar_lea.vmem [#allocation7], %s557
        // Predicated region
        $region109: #{tpu_custom_call.1} parent=27 // pred_check
          %p559 = pneg %p94
        $region110: #{tpu_custom_call.1} parent=27 // pred_check_branch
          %561 = sbr.rel (%p559) target = $region112
        $region111: #{tpu_custom_call.1} parent=27 // pred_region
          %s563 = ssub.s32 128, 128
          %564 = vsyncadd %s555, %s563
          %s565 = smul.addr %s29, 128
          %s566 = scalar_lea.hbm %s5, %s565
          %s568 = sshll.u32 %s558, 4
          %s569 = int_to_ptr.vmem [resolvable:$true] %s568
          %571 = dma.vmem_to_hbm [thread:$0]  %s569, 128, %s566, %s555
        $region112: #{tpu_custom_call.1} parent=27 // pred_fallthru
          _
      $region28: #{tpu_custom_call.1} parent=5 // pred_fallthru
        _
      %p572 = scmp.le.s32.totalorder 2, %s24
      // Predicated region
      $region113: #{tpu_custom_call.1} parent=5 // pred_check
        %p573 = pneg %p572
      $region114: #{tpu_custom_call.1} parent=5 // pred_check_branch
        %575 = sbr.rel (%p573) target = $region116
      $region115: #{tpu_custom_call.1} parent=5 // pred_region
        %s576 = ssub.s32 %s24, 2
        // Predicated region
        $region117: #{tpu_custom_call.1} parent=115 // pred_check
          %p577 = pneg %p100
        $region118: #{tpu_custom_call.1} parent=115 // pred_check_branch
          %579 = sbr.rel (%p577) target = $region120
        $region119: #{tpu_custom_call.1} parent=115 // pred_region
          %s580 = sand.u32 %s85, 1
          %s581 = scalar_lea.sflag [#allocation8], %s580
          %s582 = sand.u32 %s85, 1
          %s583 = smul.addr %s582, 8
          %s584 = scalar_lea.vmem [#allocation7], %s583
          %585 = dma.done %s581, 128
        $region120: #{tpu_custom_call.1} parent=115 // pred_fallthru
          _
      $region116: #{tpu_custom_call.1} parent=5 // pred_fallthru
        _
    $region6: #{tpu_custom_call.1} parent=1 // loop_footer
      %s28 = sadd.s32 1, %s24
    $region7: #{tpu_custom_call.1} parent=1 // loop_footer_branch
      %23 = sbr.rel target = $region3
    $region8: #{tpu_custom_call.1} parent=1 // loop_exit
      _
    %586 = vsyncpa [#allocation8], 1
    %s587 = scalar_lea.sflag [#allocation8], 1
    %588 = vsyncpa %s587, 1
  %589 = vsyncmov [#allocation3]
  %s590 = vpop.sfrf %589
  %p591 = scmp.eq.s32.totalorder %s590, 0
  %p592 = pneg %p591
  %594 = shalt.err (%p592)
  %s595 = scalar_lea.sflag [#allocation3], 1
  %596 = vsyncmov %s595
  %s597 = vpop.sfrf %596
  %p598 = scmp.eq.s32.totalorder %s597, 0
  %p599 = pneg %p598
  %601 = shalt.err (%p599)

</llo_original>
